<compile_context>
chip_gen: v6e
topology: v6e:2x2x1
jax: 0.10.0
libtpu: 0.0.40
codegen_flags: <defaults>
</compile_context>

<pallas_src>
import numpy as np

import jax
import jax.numpy as jnp
from jax import lax
from jax.experimental import pallas as pl
from jax.experimental.pallas import tpu as pltpu


def _force_pair(v):
    if isinstance(v, tuple):
        assert len(v) == 2
        return (int(v[0]), int(v[1]))
    return (int(v), int(v))


def _round_up(x, m):
    return (x + m - 1) // m * m


def _largest_divisor_tile(dim, candidates):
    for c in candidates:
        if dim % c == 0:
            return c
    return dim


# ----------------------------- kernels -----------------------------


def _conv_matmul_kernel_direct(w_ref, a_ref, o_ref):
    """Single K tile: write the MXU result straight to the output block."""
    o_ref[0] = jnp.dot(
        w_ref[...], a_ref[0],
        preferred_element_type=jnp.float32,
        precision=lax.Precision.HIGHEST,
    ).astype(o_ref.dtype)


def _conv_matmul_kernel_acc(w_ref, a_ref, o_ref, acc_ref):
    """K-tiled reduction with a VMEM f32 accumulator (K is grid axis 3)."""
    @pl.when(pl.program_id(3) == 0)
    def _():
        acc_ref[...] = jnp.zeros_like(acc_ref)

    acc_ref[...] += jnp.dot(
        w_ref[...], a_ref[0],
        preferred_element_type=jnp.float32,
        precision=lax.Precision.HIGHEST,
    )

    @pl.when(pl.program_id(3) == pl.num_programs(3) - 1)
    def _():
        o_ref[0] = acc_ref[...].astype(o_ref.dtype)


# ------------------------- pallas_call wrapper -------------------------


def _conv_gemm(w_pad, a_t, *, out_dtype):
    """out[b] = w_pad @ a_t[b].

    w_pad: (OCp, Kp)   a_t: (B, Kp, Mp)   ->   (B, OCp, Mp)
    OCp is a multiple of 8 (or 256 when large); Kp / Mp are either lane/sublane
    aligned or used as single full-extent blocks.
    """
    ocp, kp = w_pad.shape
    bsz, kp2, mp = a_t.shape
    assert kp == kp2

    # --- tile selection (few MiB per step; fits v5e/v6e/v7x scoped VMEM) ---
    tile_oc = ocp if ocp <= 512 else 256
    assert ocp % tile_oc == 0

    if mp % 128 == 0:
        tile_m = _largest_divisor_tile(mp, (512, 256, 128))
    else:
        tile_m = mp  # full-extent block (allowed; only for modest M)

    if kp <= 1024:
        tile_k = kp  # single K step -> no accumulator round trip
    else:
        tile_k = _largest_divisor_tile(kp, (512, 256, 128))
    assert kp % tile_k == 0

    grid = (bsz, ocp // tile_oc, mp // tile_m, kp // tile_k)
    kt = grid[3]

    in_specs = [
        pl.BlockSpec((tile_oc, tile_k), lambda b, oi, mi, ki: (oi, ki)),
        pl.BlockSpec((1, tile_k, tile_m), lambda b, oi, mi, ki: (b, ki, mi)),
    ]
    out_specs = pl.BlockSpec((1, tile_oc, tile_m),
                             lambda b, oi, mi, ki: (b, oi, mi))

    if kt == 1:
        kernel = _conv_matmul_kernel_direct
        scratch = []
    else:
        kernel = _conv_matmul_kernel_acc
        scratch = [pltpu.VMEM((tile_oc, tile_m), jnp.float32)]

    flops = 2 * bsz * ocp * mp * kp
    bytes_accessed = 4 * (bsz * kp * mp + ocp * kp + bsz * ocp * mp)

    return pl.pallas_call(
        kernel,
        out_shape=jax.ShapeDtypeStruct((bsz, ocp, mp), out_dtype),
        grid_spec=pltpu.PrefetchScalarGridSpec(
            num_scalar_prefetch=0,
            grid=grid,
            in_specs=in_specs,
            out_specs=out_specs,
            scratch_shapes=scratch,
        ),
        compiler_params=pltpu.CompilerParams(
            dimension_semantics=("parallel", "parallel", "parallel",
                                 "arbitrary"),
        ),
        cost_estimate=pl.CostEstimate(
            flops=flops, transcendentals=0, bytes_accessed=bytes_accessed),
    )(w_pad, a_t)


# ----------------------------- conv2d -----------------------------


def conv2d_pallas(x_nchw, weight_oihw, stride=1, padding=0):
    """Conv2d, bias=False.  x: (B, IC, H, W), weight: (OC, IC, KH, KW)."""
    sh, sw = _force_pair(stride)
    ph, pw = _force_pair(padding)

    b, ic, h, w = x_nchw.shape
    oc, ic2, kh, kw = weight_oihw.shape
    assert ic == ic2, "in_channels for x and weights don't match up"

    oh = 1 + (h + 2 * ph - kh) // sh
    ow = 1 + (w + 2 * pw - kw) // sw
    assert oh >= 1 and ow >= 1

    m = oh * ow
    k = kh * kw * ic

    # Padded matmul dims (padding of K is folded into the im2col concat below,
    # so no extra full pass over the inflated activation).
    if k <= 1024:
        kp = _round_up(k, 8)          # sublane-aligned, single K tile
    else:
        kp = _round_up(k, 128)        # lane-aligned for K tiling
    ocp = _round_up(oc, 8) if oc <= 512 else _round_up(oc, 256)
    if m % 128 == 0 or m <= 1024:
        mp = m                        # lane-dense or single full block
    else:
        # TODO(synk): large non-128-multiple M incurs one jnp.pad pass on A_T.
        mp = _round_up(m, 128)

    # ------------- wrapper layout glue (no compute), stays NCHW -------------
    x_pad = jnp.pad(x_nchw, ((0, 0), (0, 0), (ph, ph), (pw, pw)))

    # im2col, built directly in transposed (K, M) order per batch:
    # one (possibly strided) NCHW slice per kernel tap, flattened over (OH,OW)
    # and concatenated along the K axis.  K-order is (kh, kw, ic); M-order is
    # (oh, ow).  The zero block appended at the end realizes the K padding
    # inside the same concatenate.
    taps = []
    for i in range(kh):
        for j in range(kw):
            tap = x_pad[:, :, i:i + oh * sh:sh, j:j + ow * sw:sw]
            taps.append(tap.reshape(b, ic, m))
    if kp > k:
        taps.append(jnp.zeros((b, kp - k, m), dtype=x_nchw.dtype))
    a_t = jnp.concatenate(taps, axis=1)                   # (B, Kp, M)
    if mp > m:
        a_t = jnp.pad(a_t, ((0, 0), (0, 0), (0, mp - m)))

    # Weights: OIHW -> (OC, KH, KW, IC) -> (OC, K), same (kh, kw, ic) K-order,
    # then tiny zero-pad to (OCp, Kp).
    w_mat = jnp.transpose(weight_oihw, (0, 2, 3, 1)).reshape(oc, k)
    w_pad = jnp.pad(w_mat, ((0, ocp - oc), (0, kp - k)))

    # ---------------- the actual compute: batched MXU matmul ----------------
    out = _conv_gemm(w_pad, a_t, out_dtype=x_nchw.dtype)  # (B, OCp, Mp)

    # ---------------- slice off padding; already NCHW ----------------
    return out[:, :oc, :m].reshape(b, oc, oh, ow)


class Conv2dPallas:
    """Mirror of the PyTorch Conv2d module (bias=False)."""

    def __init__(self, in_channels, out_channels, kernel_size,
                 stride=1, padding=0, *, key):
        self.in_channels = in_channels
        self.out_channels = out_channels
        self.kernel_size = kernel_size
        self.stride = stride
        self.padding = padding
        kernel_height, kernel_width = _force_pair(kernel_size)
        sf = 1.0 / np.sqrt(in_channels * kernel_width * kernel_height)
        # U(-sf, sf), matching  sf * (2*rand - 1)
        self.weight = sf * (
            2.0 * jax.random.uniform(
                key,
                (out_channels, in_channels, kernel_height, kernel_width),
                dtype=jnp.float32)
            - 1.0
        )

    def __call__(self, x):
        return conv2d_pallas(x, self.weight, self.stride, self.padding)


def _reference_conv2d(x, w, stride, padding):
    sh, sw = _force_pair(stride)
    ph, pw = _force_pair(padding)
    return lax.conv_general_dilated(
        x, w, window_strides=(sh, sw),
        padding=((ph, ph), (pw, pw)),
        dimension_numbers=("NCHW", "OIHW", "NCHW"),
    )


if __name__ == "__main__":
    key = jax.random.PRNGKey(0)
    k_x, k_w, k_x2, k_w2 = jax.random.split(key, 4)

    # --- case 1: the module's canonical small shapes ---
    B, IC, H, W = 2, 4, 16, 16
    OC, K = 8, 3
    stride, padding = 1, 1

    x = jax.random.normal(k_x, (B, IC, H, W), dtype=jnp.float32)
    conv = Conv2dPallas(IC, OC, K, stride=stride, padding=padding, key=k_w)
    out = jax.block_until_ready(conv(x))
    ref = _reference_conv2d(x, conv.weight, stride, padding)
    assert out.shape == (B, OC, H, W), out.shape
    np.testing.assert_allclose(np.asarray(out), np.asarray(ref),
                               rtol=1e-5, atol=1e-5)

    # --- case 2: stride 2, odd spatial size, non-matching channel counts ---
    B2, IC2, H2, W2 = 2, 3, 15, 15
    OC2, K2 = 5, 3
    x2 = jax.random.normal(k_x2, (B2, IC2, H2, W2), dtype=jnp.float32)
    conv2 = Conv2dPallas(IC2, OC2, K2, stride=2, padding=1, key=k_w2)
    out2 = jax.block_until_ready(conv2(x2))
    ref2 = _reference_conv2d(x2, conv2.weight, 2, 1)
    np.testing.assert_allclose(np.asarray(out2), np.asarray(ref2),
                               rtol=1e-5, atol=1e-5)

    print("KERNEL_OK")
</pallas_src>

<mosaic_0001>
module attributes {stable_mosaic.version = 11 : i64} {
  func.func @_conv_matmul_kernel_direct(%arg0: i32, %arg1: i32, %arg2: i32, %arg3: i32, %arg4: memref<8x40xf32, #tpu.memory_space<vmem>>, %arg5: memref<1x40x256xf32, #tpu.memory_space<vmem>>, %arg6: memref<1x8x256xf32, #tpu.memory_space<vmem>>) attributes {dimension_semantics = [#tpu.dimension_semantics<parallel>, #tpu.dimension_semantics<parallel>, #tpu.dimension_semantics<parallel>, #tpu.dimension_semantics<arbitrary>], iteration_bounds = array<i64: 2, 1, 1, 1>, scalar_prefetch = 0 : i64, scratch_operands = 0 : i64, tpu.core_type = #tpu.core_type<tc>, window_params = [{transform_indices = @transform_0, window_bounds = array<i64: 8, 40>}, {transform_indices = @transform_1, window_bounds = array<i64: 1, 40, 256>}, {transform_indices = @transform_2, window_bounds = array<i64: 1, 8, 256>}]} {
    %c0 = arith.constant 0 : index
    %c0_0 = arith.constant 0 : index
    %0 = vector.load %arg4[%c0, %c0_0] : memref<8x40xf32, #tpu.memory_space<vmem>>, vector<8x40xf32>
    %c0_1 = arith.constant 0 : index
    %c0_2 = arith.constant 0 : index
    %c0_3 = arith.constant 0 : index
    %1 = vector.load %arg5[%c0_1, %c0_2, %c0_3] : memref<1x40x256xf32, #tpu.memory_space<vmem>>, vector<1x40x256xf32>
    %2 = vector.shape_cast %1 : vector<1x40x256xf32> to vector<40x256xf32>
    %cst = arith.constant dense<0.000000e+00> : vector<8x256xf32>
    %3 = tpu.matmul %0, %2, %cst {dimension_numbers = #tpu.dot_dimension_numbers<[1], [0], [0], [1], [0, 0, 1, 1], [], []>, precision = #tpu.contract_precision<fp32>} : vector<8x40xf32>, vector<40x256xf32>, vector<8x256xf32> -> vector<8x256xf32>
    %c0_4 = arith.constant 0 : index
    %c0_5 = arith.constant 0 : index
    %c0_6 = arith.constant 0 : index
    %4 = vector.load %arg6[%c0_4, %c0_5, %c0_6] : memref<1x8x256xf32, #tpu.memory_space<vmem>>, vector<1x8x256xf32>
    %5 = vector.shape_cast %4 : vector<1x8x256xf32> to vector<8x256xf32>
    %6 = vector.shape_cast %3 : vector<8x256xf32> to vector<1x8x256xf32>
    tpu.vector_store %arg6[%c0_4, %c0_5, %c0_6], %6 {strides = array<i32>} : memref<1x8x256xf32, #tpu.memory_space<vmem>>, vector<1x8x256xf32>,
    return
  }
  func.func @transform_0(%arg0: i32, %arg1: i32, %arg2: i32, %arg3: i32) -> (i32, i32) {
    %c0_i32 = arith.constant 0 : i32
    return %arg1, %arg3 : i32, i32
  }
  func.func @transform_1(%arg0: i32, %arg1: i32, %arg2: i32, %arg3: i32) -> (i32, i32, i32) {
    %c0_i32 = arith.constant 0 : i32
    return %arg0, %arg3, %arg2 : i32, i32, i32
  }
  func.func @transform_2(%arg0: i32, %arg1: i32, %arg2: i32, %arg3: i32) -> (i32, i32, i32) {
    %c0_i32 = arith.constant 0 : i32
    return %arg0, %arg1, %arg2 : i32, i32, i32
  }
}

</mosaic_0001>

<llo_original>
// kernel: tpu_custom_call.1
$region0: #{tpu_custom_call.1}
  #allocation0 [shape = 'u32[]', space=smem, size = 0x4, offset = 0x4, fixed_abs, tag = 'smem constant byte address 0x4 - core index']
  #allocation1 [shape = 'u32[144,128]{1,0:T(1,128)}', space=vmem, size = 0x12000, scoped, tag = 'internal scratch']
  %s0 = inlined_call_operand.hbm [shape: f32[8,40], index: 0, kind: input, shape index: {}]
  %s1 = inlined_call_operand.hbm [shape: f32[2,40,256], index: 1, kind: input, shape index: {}]
  %s2 = inlined_call_operand.hbm [shape: f32[2,8,256], index: 2, kind: output, shape index: {}]
  %s3 = sld [smem:[#allocation0]]
  $region49: #{tpu_custom_call.1} parent=0
    _
  %s5 = ssub.s32 1, %s3
  %s6 = scalar_select 0, %s5, %s3
  $region1: #{tpu_custom_call.1} parent=0
    #allocation2 [shape = 'u8[4096]{0}', space=vmem, size = 0x1000, scoped, tag = 'input window, operand 0, single buffered']
    #allocation3 [shape = 's32[2]{0}', space=sflag, size = 0x8, scoped, tag = 'scoped memory for tpu_custom_call.1']
    #allocation4 [shape = 's32[2]{0}', space=sflag, size = 0x8, scoped, tag = 'scoped memory for tpu_custom_call.1']
    #allocation5 [shape = 'u8[81920]{0}', space=vmem, size = 0x14000, scoped, tag = 'input window, operand 1']
    #allocation6 [shape = 's32[2]{0}', space=sflag, size = 0x8, scoped, tag = 'scoped memory for tpu_custom_call.1']
    #allocation7 [shape = 'u8[16384]{0}', space=vmem, size = 0x4000, scoped, tag = 'output window, operand 0']
    %7 = vsyncpa [#allocation3], 0
    %8 = vsyncpa [#allocation6], 0
    %s9 = scalar_lea.sflag [#allocation6], 1
    %10 = vsyncpa %s9, 0
    %11 = vsyncpa [#allocation4], 0
    %s12 = scalar_lea.sflag [#allocation4], 1
    %13 = vsyncpa %s12, 0
    loop: start=0, step=1, limit=4
    $region2: #{tpu_custom_call.1} parent=1 // loop_pre_header
      _
    $region3: #{tpu_custom_call.1} parent=1 // loop_header
      %s15 = sphi 0, %s19
      %p16 = scmp.ge.s32.totalorder %s15, 4
      %s22 = sphi 0, %s48
      %s23 = sphi 0, %s44
      %s24 = sphi 0, %s40
      %s25 = sphi 0, %s36
      %s26 = sphi 0, %s22
      %s27 = sphi 0, %s23
      %s28 = sphi 0, %s24
      %s29 = sphi 0, %s25
      %s30 = sphi 0, %s26
      %s31 = sphi 0, %s27
      %s32 = sphi 0, %s28
      %s33 = sphi 0, %s29
      %s53 = sphi 0, %s55
      %s56 = sphi 0, %s53
      %s57 = sphi 0, %s56
      %s73 = sphi 0, %s57
      %s83 = sphi 0, %s85
      %s86 = sphi 0, %s83
      %s87 = sphi 0, %s86
      %s103 = sphi 0, %s87
      %s113 = sphi 0, %s115
      %s116 = sphi 0, %s113
      %s117 = sphi 0, %s116
      %s133 = sphi 0, %s117
    $region4: #{tpu_custom_call.1} parent=1 // loop_header_branch
      %18 = sbr.rel (%p16) target = $region8
    $region5: #{tpu_custom_call.1} parent=1 // loop_body
      %s20 = ssub.s32 %s15, 1
      %s21 = ssub.s32 %s15, 2
      %s34 = sadd.s32 1, %s25
      %p35 = scmp.ge.s32.totalorder %s34, 1
      %s36 = scalar_select %p35, 0, %s34
      %s37 = sadd.s32 1, %s24
      %s38 = scalar_select %p35, %s37, %s24
      %p39 = scmp.ge.s32.totalorder %s38, 1
      %s40 = scalar_select %p39, 0, %s38
      %s41 = sadd.s32 1, %s23
      %s42 = scalar_select %p39, %s41, %s23
      %p43 = scmp.ge.s32.totalorder %s42, 1
      %s44 = scalar_select %p43, 0, %s42
      %s45 = sadd.s32 1, %s22
      %s46 = scalar_select %p43, %s45, %s22
      %p47 = scmp.ge.s32.totalorder %s46, 2
      %s48 = scalar_select %p47, 0, %s46
      %s49 = ssub.s32 %s23, %s44
      %s50 = ssub.s32 %s25, %s36
      %s51 = sor.u32 %s49, %s50
      %p52 = scmp.eq.s32.totalorder %s51, 0
      %s54 = sadd.s32 %s53, 1
      %s55 = scalar_select %p52, %s53, %s54
      %p58 = pneg %p52
      %p59 = scmp.eq.s32.totalorder %s15, 1
      %p60 = por %p58, %p59
      %p61 = scmp.ne.s32.totalorder %s53, %s56
      %p62 = scmp.eq.s32.totalorder %s15, 0
      %p63 = por %p61, %p62
      %p64 = scmp.ne.s32.totalorder %s53, %s56
      %p65 = scmp.eq.s32.totalorder %s20, 1
      %p66 = por %p64, %p65
      %p67 = scmp.ne.s32.totalorder %s56, %s57
      %p68 = scmp.eq.s32.totalorder %s20, 0
      %p69 = por %p67, %p68
      %p70 = scmp.ne.s32.totalorder %s56, %s57
      %p71 = scmp.eq.s32.totalorder %s21, 1
      %p72 = por %p70, %p71
      %p74 = scmp.ne.s32.totalorder %s57, %s73
      %p75 = scmp.eq.s32.totalorder %s21, 0
      %p76 = por %p74, %p75
      %s77 = ssub.s32 %s22, %s48
      %s78 = ssub.s32 %s25, %s36
      %s79 = sor.u32 %s77, %s78
      %s80 = ssub.s32 %s24, %s40
      %s81 = sor.u32 %s79, %s80
      %p82 = scmp.eq.s32.totalorder %s81, 0
      %s84 = sadd.s32 %s83, 1
      %s85 = scalar_select %p82, %s83, %s84
      %p88 = pneg %p82
      %p89 = scmp.eq.s32.totalorder %s15, 1
      %p90 = por %p88, %p89
      %p91 = scmp.ne.s32.totalorder %s83, %s86
      %p92 = scmp.eq.s32.totalorder %s15, 0
      %p93 = por %p91, %p92
      %p94 = scmp.ne.s32.totalorder %s83, %s86
      %p95 = scmp.eq.s32.totalorder %s20, 1
      %p96 = por %p94, %p95
      %p97 = scmp.ne.s32.totalorder %s86, %s87
      %p98 = scmp.eq.s32.totalorder %s20, 0
      %p99 = por %p97, %p98
      %p100 = scmp.ne.s32.totalorder %s86, %s87
      %p101 = scmp.eq.s32.totalorder %s21, 1
      %p102 = por %p100, %p101
      %p104 = scmp.ne.s32.totalorder %s87, %s103
      %p105 = scmp.eq.s32.totalorder %s21, 0
      %p106 = por %p104, %p105
      %s107 = ssub.s32 %s22, %s48
      %s108 = ssub.s32 %s23, %s44
      %s109 = sor.u32 %s107, %s108
      %s110 = ssub.s32 %s24, %s40
      %s111 = sor.u32 %s109, %s110
      %p112 = scmp.eq.s32.totalorder %s111, 0
      %s114 = sadd.s32 %s113, 1
      %s115 = scalar_select %p112, %s113, %s114
      %p118 = pneg %p112
      %p119 = scmp.eq.s32.totalorder %s15, 1
      %p120 = por %p118, %p119
      %p121 = scmp.ne.s32.totalorder %s113, %s116
      %p122 = scmp.eq.s32.totalorder %s15, 0
      %p123 = por %p121, %p122
      %p124 = scmp.ne.s32.totalorder %s113, %s116
      %p125 = scmp.eq.s32.totalorder %s20, 1
      %p126 = por %p124, %p125
      %p127 = scmp.ne.s32.totalorder %s116, %s117
      %p128 = scmp.eq.s32.totalorder %s20, 0
      %p129 = por %p127, %p128
      %p130 = scmp.ne.s32.totalorder %s116, %s117
      %p131 = scmp.eq.s32.totalorder %s21, 1
      %p132 = por %p130, %p131
      %p134 = scmp.ne.s32.totalorder %s117, %s133
      %p135 = scmp.eq.s32.totalorder %s21, 0
      %p136 = por %p134, %p135
      %p137 = scmp.le.s32.totalorder 1, %s15
      %p138 = scmp.lt.s32.totalorder %s15, 3
      %p139 = pnand %p137, %p138
      %p140 = pneg %p139
      // Predicated region
      $region9: #{tpu_custom_call.1} parent=5 // pred_check
        _
      $region10: #{tpu_custom_call.1} parent=5 // pred_check_branch
        %142 = sbr.rel (%p139) target = $region12
      $region11: #{tpu_custom_call.1} parent=5 // pred_region
        %s143 = ssub.s32 %s15, 1
        // Predicated region
        $region13: #{tpu_custom_call.1} parent=11 // pred_check
          %p144 = pneg %p69
        $region14: #{tpu_custom_call.1} parent=11 // pred_check_branch
          %146 = sbr.rel (%p144) target = $region16
        $region15: #{tpu_custom_call.1} parent=11 // pred_region
          %s148 = ssub.s32 128, 128
          %149 = vsyncadd [#allocation3], %s148
          %s150 = sadd.s32 %s29, %s27
          %s151 = smul.addr %s150, 128
          %s152 = scalar_lea.hbm %s0, %s151
          %s154 = sshll.u32 [#allocation2], 4
          %s155 = int_to_ptr.vmem [resolvable:$true] %s154
          %157 = dma.hbm_to_vmem [thread:$0]  %s152, 128, %s155, [#allocation3]
        $region16: #{tpu_custom_call.1} parent=11 // pred_fallthru
          _
      $region12: #{tpu_custom_call.1} parent=5 // pred_fallthru
        _
      %p158 = scmp.lt.s32.totalorder %s15, 2
      // Predicated region
      $region17: #{tpu_custom_call.1} parent=5 // pred_check
        %p159 = pneg %p158
      $region18: #{tpu_custom_call.1} parent=5 // pred_check_branch
        %161 = sbr.rel (%p159) target = $region20
      $region19: #{tpu_custom_call.1} parent=5 // pred_region
        // Predicated region
        $region21: #{tpu_custom_call.1} parent=19 // pred_check
          %p162 = pneg %p93
        $region22: #{tpu_custom_call.1} parent=19 // pred_check_branch
          %164 = sbr.rel (%p162) target = $region24
        $region23: #{tpu_custom_call.1} parent=19 // pred_region
          %s165 = sand.u32 %s83, 1
          %s166 = scalar_lea.sflag [#allocation6], %s165
          %s167 = sand.u32 %s83, 1
          %s168 = smul.addr %s167, 80
          %s169 = scalar_lea.vmem [#allocation5], %s168
          %s170 = smul.u32 5, %s25
          %s171 = smul.u32 2, %s24
          %s173 = ssub.s32 1280, 1280
          %174 = vsyncadd %s166, %s173
          %s175 = smul.addr %s170, 2
          %s176 = sadd.s32 %s171, %s175
          %s177 = smul.addr %s22, 10
          %s178 = sadd.s32 %s176, %s177
          %s179 = smul.addr %s178, 128
          %s180 = scalar_lea.hbm %s1, %s179
          %s181 = sshll.u32 %s169, 4
          %s182 = int_to_ptr.vmem [resolvable:$true] %s181
          %187 = dma.hbm_to_vmem [thread:$0]  %s180, 1280, %s182, %s166, 256, 256, 16
        $region24: #{tpu_custom_call.1} parent=19 // pred_fallthru
          _
      $region20: #{tpu_custom_call.1} parent=5 // pred_fallthru
        _
      %p188 = scmp.le.s32.totalorder 1, %s15
      %p189 = scmp.lt.s32.totalorder %s15, 3
      %p190 = pnand %p188, %p189
      %p191 = pneg %p190
      // Predicated region
      $region25: #{tpu_custom_call.1} parent=5 // pred_check
        _
      $region26: #{tpu_custom_call.1} parent=5 // pred_check_branch
        %193 = sbr.rel (%p190) target = $region28
      $region27: #{tpu_custom_call.1} parent=5 // pred_region
        %s194 = ssub.s32 %s15, 1
        // Predicated region
        $region29: #{tpu_custom_call.1} parent=27 // pred_check
          %p195 = pneg %p69
        $region30: #{tpu_custom_call.1} parent=27 // pred_check_branch
          %197 = sbr.rel (%p195) target = $region32
        $region31: #{tpu_custom_call.1} parent=27 // pred_region
          %198 = dma.done [#allocation3], 128
        $region32: #{tpu_custom_call.1} parent=27 // pred_fallthru
          _
        %s199 = sand.u32 %s86, 1
        %s200 = scalar_lea.sflag [#allocation6], %s199
        %s201 = sand.u32 %s86, 1
        %s202 = smul.addr %s201, 80
        %s203 = scalar_lea.vmem [#allocation5], %s202
        // Predicated region
        $region33: #{tpu_custom_call.1} parent=27 // pred_check
          %p204 = pneg %p99
        $region34: #{tpu_custom_call.1} parent=27 // pred_check_branch
          %206 = sbr.rel (%p204) target = $region36
        $region35: #{tpu_custom_call.1} parent=27 // pred_region
          %207 = dma.done %s200, 1280
        $region36: #{tpu_custom_call.1} parent=27 // pred_fallthru
          _
        %p208 = pneg %p69
        %p209 = pneg %p66
        %s210 = sand.u32 %s86, 1
        %s211 = scalar_lea.sflag [#allocation6], %s210
        %s212 = sand.u32 %s86, 1
        %s213 = smul.addr %s212, 80
        %s214 = scalar_lea.vmem [#allocation5], %s213
        %p215 = pneg %p99
        %p216 = pneg %p96
        %p217 = pneg %p129
        %p218 = pneg %p126
        %s219 = sand.u32 %s116, 1
        %s220 = scalar_lea.sflag [#allocation4], %s219
        %s221 = sand.u32 %s116, 1
        %s222 = smul.addr %s221, 16
        %s223 = scalar_lea.vmem [#allocation7], %s222
        %s224 = smul.u32 5, %s29
        %s225 = smul.u32 2, %s28
        %s226 = smul.u32 2, %s28
        %v227 = vld [vmem:[#allocation2] sm:$0xff]
        %v228 = vld [vmem:[%s203] sm:$0xff]
        %v229 = vld [vmem:[%s203 + $0x8] sm:$0xff]
        %v230 = vld [vmem:[%s203 + $0x10] sm:$0xff]
        %v231 = vld [vmem:[%s203 + $0x18] sm:$0xff]
        %v232 = vld [vmem:[%s203 + $0x20] sm:$0xff]
        %v233 = vld [vmem:[%s203 + $0x28] sm:$0xff]
        %v234 = vld [vmem:[%s203 + $0x30] sm:$0xff]
        %v235 = vld [vmem:[%s203 + $0x38] sm:$0xff]
        %v236 = vld [vmem:[%s203 + $0x40] sm:$0xff]
        %v237 = vld [vmem:[%s203 + $0x48] sm:$0xff]
        %vm238 = vcmask 326656
        %v240 = vsel %vm238, %v227, 0
        %242 = vmatprep.subr.mxu0 0.0
        %243 = vmatpush1.msra.mxu0 0.0
        %244 = vmatprep.subr.mxu0 0.0
        %245 = vmatpush1.msra.mxu0 0.0
        %246 = vmatprep.subr.mxu0 0.0
        %247 = vmatpush1.msra.mxu0 0.0
        %248 = vmatprep.subr.mxu0 0.0
        %249 = vmatpush1.msra.mxu0 0.0
        %250 = vmatprep.subr.mxu0 0.0
        %251 = vmatpush1.msra.mxu0 0.0
        %252 = vmatprep.subr.mxu0 0.0
        %253 = vmatpush1.msra.mxu0 0.0
        %254 = vmatprep.subr.mxu0 0.0
        %255 = vmatpush1.msra.mxu0 0.0
        %256 = vmatprep.subr.mxu0 0.0
        %257 = vmatpush1.msra.mxu0 0.0
        %258 = vmatprep.subr.mxu0 0.0
        %259 = vmatpush1.msra.mxu0 0.0
        %260 = vmatprep.subr.mxu0 0.0
        %261 = vmatpush1.msra.mxu0 0.0
        %262 = vmatprep.subr.mxu0 0.0
        %263 = vmatpush1.msra.mxu0 0.0
        %v264 = vand.u32 %v237, 4294901760
        %265 = vmatprep.subr.mxu0 %v264
        %v266 = vand.u32 %v236, 4294901760
        %267 = vmatpush1.msra.mxu0 %v266
        %v268 = vand.u32 %v235, 4294901760
        %269 = vmatprep.subr.mxu0 %v268
        %v270 = vand.u32 %v234, 4294901760
        %271 = vmatpush1.msra.mxu0 %v270
        %v272 = vand.u32 %v233, 4294901760
        %273 = vmatprep.subr.mxu0 %v272
        %v274 = vand.u32 %v232, 4294901760
        %275 = vmatpush1.msra.mxu0 %v274
        %v276 = vand.u32 %v231, 4294901760
        %277 = vmatprep.subr.mxu0 %v276
        %v278 = vand.u32 %v230, 4294901760
        %279 = vmatpush1.msra.mxu0 %v278
        %v280 = vand.u32 %v229, 4294901760
        %281 = vmatprep.subr.mxu0 %v280
        %v282 = vand.u32 %v228, 4294901760
        %283 = vmatpush1.msra.mxu0 %v282
        %284 = vmatprep.subr.mxu0 0.0
        %285 = vmatpush2.msra.mxu0 0.0
        %286 = vmatprep.subr.mxu0 0.0
        %287 = vmatpush2.msra.mxu0 0.0
        %288 = vmatprep.subr.mxu0 0.0
        %289 = vmatpush2.msra.mxu0 0.0
        %290 = vmatprep.subr.mxu0 0.0
        %291 = vmatpush2.msra.mxu0 0.0
        %292 = vmatprep.subr.mxu0 0.0
        %293 = vmatpush2.msra.mxu0 0.0
        %294 = vmatprep.subr.mxu0 0.0
        %295 = vmatpush2.msra.mxu0 0.0
        %296 = vmatprep.subr.mxu0 0.0
        %297 = vmatpush2.msra.mxu0 0.0
        %298 = vmatprep.subr.mxu0 0.0
        %299 = vmatpush2.msra.mxu0 0.0
        %300 = vmatprep.subr.mxu0 0.0
        %301 = vmatpush2.msra.mxu0 0.0
        %302 = vmatprep.subr.mxu0 0.0
        %303 = vmatpush2.msra.mxu0 0.0
        %304 = vmatprep.subr.mxu0 0.0
        %305 = vmatpush2.msra.mxu0 0.0
        %306 = vmatprep.subr.mxu0 0.0
        %307 = vmatpush2.msra.mxu0 0.0
        %308 = vmatprep.subr.mxu0 0.0
        %309 = vmatpush2.msra.mxu0 0.0
        %310 = vmatprep.subr.mxu0 0.0
        %311 = vmatpush2.msra.mxu0 0.0
        %312 = vmatprep.subr.mxu0 0.0
        %313 = vmatpush2.msra.mxu0 0.0
        %314 = vmatprep.subr.mxu0 0.0
        %315 = vmatpush2.msra.mxu0 0.0
        %316 = vmatprep.mubr.f32.mxu0 0.0
        %v317 = vand.u32 %v240, 4294901760
        %v318 = vsub.f32 %v240, %v317
        %v319 = vand.u32 %v318, 4294901760
        %v320 = vsub.f32 %v318, %v319
        %v321 = vand.u32 %v320, 4294901760
        %322 = vmatmul.mubr.f32.gmra.mxu0 %v321
        %v323 = vpop.f32.mrf.mxu0
        %v324 = vadd.f32 0.0, %v323
        %v325 = vpop.f32.mrf.mxu0
        %v326 = vadd.f32 0.0, %v325
        %327 = vdwg.mxu0
        %328 = vmatprep.subr.mxu0 0.0
        %329 = vmatpush1.msra.mxu0 0.0
        %330 = vmatprep.subr.mxu0 0.0
        %331 = vmatpush1.msra.mxu0 0.0
        %332 = vmatprep.subr.mxu0 0.0
        %333 = vmatpush1.msra.mxu0 0.0
        %334 = vmatprep.subr.mxu0 0.0
        %335 = vmatpush1.msra.mxu0 0.0
        %336 = vmatprep.subr.mxu0 0.0
        %337 = vmatpush1.msra.mxu0 0.0
        %338 = vmatprep.subr.mxu0 0.0
        %339 = vmatpush1.msra.mxu0 0.0
        %340 = vmatprep.subr.mxu0 0.0
        %341 = vmatpush1.msra.mxu0 0.0
        %342 = vmatprep.subr.mxu0 0.0
        %343 = vmatpush1.msra.mxu0 0.0
        %344 = vmatprep.subr.mxu0 0.0
        %345 = vmatpush1.msra.mxu0 0.0
        %346 = vmatprep.subr.mxu0 0.0
        %347 = vmatpush1.msra.mxu0 0.0
        %348 = vmatprep.subr.mxu0 0.0
        %349 = vmatpush1.msra.mxu0 0.0
        %v350 = vand.u32 %v237, 4294901760
        %v351 = vsub.f32 %v237, %v350
        %v352 = vand.u32 %v351, 4294901760
        %v353 = vsub.f32 %v351, %v352
        %v354 = vand.u32 %v353, 4294901760
        %355 = vmatprep.subr.mxu0 %v354
        %v356 = vand.u32 %v236, 4294901760
        %v357 = vsub.f32 %v236, %v356
        %v358 = vand.u32 %v357, 4294901760
        %v359 = vsub.f32 %v357, %v358
        %v360 = vand.u32 %v359, 4294901760
        %361 = vmatpush1.msra.mxu0 %v360
        %v362 = vand.u32 %v235, 4294901760
        %v363 = vsub.f32 %v235, %v362
        %v364 = vand.u32 %v363, 4294901760
        %v365 = vsub.f32 %v363, %v364
        %v366 = vand.u32 %v365, 4294901760
        %367 = vmatprep.subr.mxu0 %v366
        %v368 = vand.u32 %v234, 4294901760
        %v369 = vsub.f32 %v234, %v368
        %v370 = vand.u32 %v369, 4294901760
        %v371 = vsub.f32 %v369, %v370
        %v372 = vand.u32 %v371, 4294901760
        %373 = vmatpush1.msra.mxu0 %v372
        %v374 = vand.u32 %v233, 4294901760
        %v375 = vsub.f32 %v233, %v374
        %v376 = vand.u32 %v375, 4294901760
        %v377 = vsub.f32 %v375, %v376
        %v378 = vand.u32 %v377, 4294901760
        %379 = vmatprep.subr.mxu0 %v378
        %v380 = vand.u32 %v232, 4294901760
        %v381 = vsub.f32 %v232, %v380
        %v382 = vand.u32 %v381, 4294901760
        %v383 = vsub.f32 %v381, %v382
        %v384 = vand.u32 %v383, 4294901760
        %385 = vmatpush1.msra.mxu0 %v384
        %v386 = vand.u32 %v231, 4294901760
        %v387 = vsub.f32 %v231, %v386
        %v388 = vand.u32 %v387, 4294901760
        %v389 = vsub.f32 %v387, %v388
        %v390 = vand.u32 %v389, 4294901760
        %391 = vmatprep.subr.mxu0 %v390
        %v392 = vand.u32 %v230, 4294901760
        %v393 = vsub.f32 %v230, %v392
        %v394 = vand.u32 %v393, 4294901760
        %v395 = vsub.f32 %v393, %v394
        %v396 = vand.u32 %v395, 4294901760
        %397 = vmatpush1.msra.mxu0 %v396
        %v398 = vand.u32 %v229, 4294901760
        %v399 = vsub.f32 %v229, %v398
        %v400 = vand.u32 %v399, 4294901760
        %v401 = vsub.f32 %v399, %v400
        %v402 = vand.u32 %v401, 4294901760
        %403 = vmatprep.subr.mxu0 %v402
        %v404 = vand.u32 %v228, 4294901760
        %v405 = vsub.f32 %v228, %v404
        %v406 = vand.u32 %v405, 4294901760
        %v407 = vsub.f32 %v405, %v406
        %v408 = vand.u32 %v407, 4294901760
        %409 = vmatpush1.msra.mxu0 %v408
        %410 = vmatprep.subr.mxu0 0.0
        %411 = vmatpush2.msra.mxu0 0.0
        %412 = vmatprep.subr.mxu0 0.0
        %413 = vmatpush2.msra.mxu0 0.0
        %414 = vmatprep.subr.mxu0 0.0
        %415 = vmatpush2.msra.mxu0 0.0
        %416 = vmatprep.subr.mxu0 0.0
        %417 = vmatpush2.msra.mxu0 0.0
        %418 = vmatprep.subr.mxu0 0.0
        %419 = vmatpush2.msra.mxu0 0.0
        %420 = vmatprep.subr.mxu0 0.0
        %421 = vmatpush2.msra.mxu0 0.0
        %422 = vmatprep.subr.mxu0 0.0
        %423 = vmatpush2.msra.mxu0 0.0
        %424 = vmatprep.subr.mxu0 0.0
        %425 = vmatpush2.msra.mxu0 0.0
        %426 = vmatprep.subr.mxu0 0.0
        %427 = vmatpush2.msra.mxu0 0.0
        %428 = vmatprep.subr.mxu0 0.0
        %429 = vmatpush2.msra.mxu0 0.0
        %430 = vmatprep.subr.mxu0 0.0
        %431 = vmatpush2.msra.mxu0 0.0
        %432 = vmatprep.subr.mxu0 0.0
        %433 = vmatpush2.msra.mxu0 0.0
        %434 = vmatprep.subr.mxu0 0.0
        %435 = vmatpush2.msra.mxu0 0.0
        %436 = vmatprep.subr.mxu0 0.0
        %437 = vmatpush2.msra.mxu0 0.0
        %438 = vmatprep.subr.mxu0 0.0
        %439 = vmatpush2.msra.mxu0 0.0
        %440 = vmatprep.subr.mxu0 0.0
        %441 = vmatpush2.msra.mxu0 0.0
        %442 = vmatprep.mubr.f32.mxu0 0.0
        %v443 = vand.u32 %v240, 4294901760
        %444 = vmatmul.mubr.f32.gmra.mxu0 %v443
        %v445 = vpop.f32.mrf.mxu0
        %v446 = vadd.f32 %v324, %v445
        %v447 = vpop.f32.mrf.mxu0
        %v448 = vadd.f32 %v326, %v447
        %449 = vdwg.mxu0
        %450 = vmatprep.subr.mxu0 0.0
        %451 = vmatpush1.msra.mxu0 0.0
        %452 = vmatprep.subr.mxu0 0.0
        %453 = vmatpush1.msra.mxu0 0.0
        %454 = vmatprep.subr.mxu0 0.0
        %455 = vmatpush1.msra.mxu0 0.0
        %456 = vmatprep.subr.mxu0 0.0
        %457 = vmatpush1.msra.mxu0 0.0
        %458 = vmatprep.subr.mxu0 0.0
        %459 = vmatpush1.msra.mxu0 0.0
        %460 = vmatprep.subr.mxu0 0.0
        %461 = vmatpush1.msra.mxu0 0.0
        %462 = vmatprep.subr.mxu0 0.0
        %463 = vmatpush1.msra.mxu0 0.0
        %464 = vmatprep.subr.mxu0 0.0
        %465 = vmatpush1.msra.mxu0 0.0
        %466 = vmatprep.subr.mxu0 0.0
        %467 = vmatpush1.msra.mxu0 0.0
        %468 = vmatprep.subr.mxu0 0.0
        %469 = vmatpush1.msra.mxu0 0.0
        %470 = vmatprep.subr.mxu0 0.0
        %471 = vmatpush1.msra.mxu0 0.0
        %v472 = vand.u32 %v237, 4294901760
        %v473 = vsub.f32 %v237, %v472
        %474 = vmatprep.subr.mxu0 %v473
        %v475 = vand.u32 %v236, 4294901760
        %v476 = vsub.f32 %v236, %v475
        %477 = vmatpush1.msra.mxu0 %v476
        %v478 = vand.u32 %v235, 4294901760
        %v479 = vsub.f32 %v235, %v478
        %480 = vmatprep.subr.mxu0 %v479
        %v481 = vand.u32 %v234, 4294901760
        %v482 = vsub.f32 %v234, %v481
        %483 = vmatpush1.msra.mxu0 %v482
        %v484 = vand.u32 %v233, 4294901760
        %v485 = vsub.f32 %v233, %v484
        %486 = vmatprep.subr.mxu0 %v485
        %v487 = vand.u32 %v232, 4294901760
        %v488 = vsub.f32 %v232, %v487
        %489 = vmatpush1.msra.mxu0 %v488
        %v490 = vand.u32 %v231, 4294901760
        %v491 = vsub.f32 %v231, %v490
        %492 = vmatprep.subr.mxu0 %v491
        %v493 = vand.u32 %v230, 4294901760
        %v494 = vsub.f32 %v230, %v493
        %495 = vmatpush1.msra.mxu0 %v494
        %v496 = vand.u32 %v229, 4294901760
        %v497 = vsub.f32 %v229, %v496
        %498 = vmatprep.subr.mxu0 %v497
        %v499 = vand.u32 %v228, 4294901760
        %v500 = vsub.f32 %v228, %v499
        %501 = vmatpush1.msra.mxu0 %v500
        %502 = vmatprep.subr.mxu0 0.0
        %503 = vmatpush2.msra.mxu0 0.0
        %504 = vmatprep.subr.mxu0 0.0
        %505 = vmatpush2.msra.mxu0 0.0
        %506 = vmatprep.subr.mxu0 0.0
        %507 = vmatpush2.msra.mxu0 0.0
        %508 = vmatprep.subr.mxu0 0.0
        %509 = vmatpush2.msra.mxu0 0.0
        %510 = vmatprep.subr.mxu0 0.0
        %511 = vmatpush2.msra.mxu0 0.0
        %512 = vmatprep.subr.mxu0 0.0
        %513 = vmatpush2.msra.mxu0 0.0
        %514 = vmatprep.subr.mxu0 0.0
        %515 = vmatpush2.msra.mxu0 0.0
        %516 = vmatprep.subr.mxu0 0.0
        %517 = vmatpush2.msra.mxu0 0.0
        %518 = vmatprep.subr.mxu0 0.0
        %519 = vmatpush2.msra.mxu0 0.0
        %520 = vmatprep.subr.mxu0 0.0
        %521 = vmatpush2.msra.mxu0 0.0
        %522 = vmatprep.subr.mxu0 0.0
        %523 = vmatpush2.msra.mxu0 0.0
        %524 = vmatprep.subr.mxu0 0.0
        %525 = vmatpush2.msra.mxu0 0.0
        %526 = vmatprep.subr.mxu0 0.0
        %527 = vmatpush2.msra.mxu0 0.0
        %528 = vmatprep.subr.mxu0 0.0
        %529 = vmatpush2.msra.mxu0 0.0
        %530 = vmatprep.subr.mxu0 0.0
        %531 = vmatpush2.msra.mxu0 0.0
        %532 = vmatprep.subr.mxu0 0.0
        %533 = vmatpush2.msra.mxu0 0.0
        %534 = vmatprep.mubr.f32.mxu0 0.0
        %v535 = vand.u32 %v240, 4294901760
        %v536 = vsub.f32 %v240, %v535
        %537 = vmatmul.mubr.f32.gmra.mxu0 %v536
        %v538 = vpop.f32.mrf.mxu0
        %v539 = vadd.f32 %v446, %v538
        %v540 = vpop.f32.mrf.mxu0
        %v541 = vadd.f32 %v448, %v540
        %542 = vdwg.mxu0
        %543 = vmatprep.subr.mxu0 0.0
        %544 = vmatpush1.msra.mxu0 0.0
        %545 = vmatprep.subr.mxu0 0.0
        %546 = vmatpush1.msra.mxu0 0.0
        %547 = vmatprep.subr.mxu0 0.0
        %548 = vmatpush1.msra.mxu0 0.0
        %549 = vmatprep.subr.mxu0 0.0
        %550 = vmatpush1.msra.mxu0 0.0
        %551 = vmatprep.subr.mxu0 0.0
        %552 = vmatpush1.msra.mxu0 0.0
        %553 = vmatprep.subr.mxu0 0.0
        %554 = vmatpush1.msra.mxu0 0.0
        %555 = vmatprep.subr.mxu0 0.0
        %556 = vmatpush1.msra.mxu0 0.0
        %557 = vmatprep.subr.mxu0 0.0
        %558 = vmatpush1.msra.mxu0 0.0
        %559 = vmatprep.subr.mxu0 0.0
        %560 = vmatpush1.msra.mxu0 0.0
        %561 = vmatprep.subr.mxu0 0.0
        %562 = vmatpush1.msra.mxu0 0.0
        %563 = vmatprep.subr.mxu0 0.0
        %564 = vmatpush1.msra.mxu0 0.0
        %v565 = vand.u32 %v237, 4294901760
        %566 = vmatprep.subr.mxu0 %v565
        %v567 = vand.u32 %v236, 4294901760
        %568 = vmatpush1.msra.mxu0 %v567
        %v569 = vand.u32 %v235, 4294901760
        %570 = vmatprep.subr.mxu0 %v569
        %v571 = vand.u32 %v234, 4294901760
        %572 = vmatpush1.msra.mxu0 %v571
        %v573 = vand.u32 %v233, 4294901760
        %574 = vmatprep.subr.mxu0 %v573
        %v575 = vand.u32 %v232, 4294901760
        %576 = vmatpush1.msra.mxu0 %v575
        %v577 = vand.u32 %v231, 4294901760
        %578 = vmatprep.subr.mxu0 %v577
        %v579 = vand.u32 %v230, 4294901760
        %580 = vmatpush1.msra.mxu0 %v579
        %v581 = vand.u32 %v229, 4294901760
        %582 = vmatprep.subr.mxu0 %v581
        %v583 = vand.u32 %v228, 4294901760
        %584 = vmatpush1.msra.mxu0 %v583
        %585 = vmatprep.subr.mxu0 0.0
        %586 = vmatpush2.msra.mxu0 0.0
        %587 = vmatprep.subr.mxu0 0.0
        %588 = vmatpush2.msra.mxu0 0.0
        %589 = vmatprep.subr.mxu0 0.0
        %590 = vmatpush2.msra.mxu0 0.0
        %591 = vmatprep.subr.mxu0 0.0
        %592 = vmatpush2.msra.mxu0 0.0
        %593 = vmatprep.subr.mxu0 0.0
        %594 = vmatpush2.msra.mxu0 0.0
        %595 = vmatprep.subr.mxu0 0.0
        %596 = vmatpush2.msra.mxu0 0.0
        %597 = vmatprep.subr.mxu0 0.0
        %598 = vmatpush2.msra.mxu0 0.0
        %599 = vmatprep.subr.mxu0 0.0
        %600 = vmatpush2.msra.mxu0 0.0
        %601 = vmatprep.subr.mxu0 0.0
        %602 = vmatpush2.msra.mxu0 0.0
        %603 = vmatprep.subr.mxu0 0.0
        %604 = vmatpush2.msra.mxu0 0.0
        %605 = vmatprep.subr.mxu0 0.0
        %606 = vmatpush2.msra.mxu0 0.0
        %607 = vmatprep.subr.mxu0 0.0
        %608 = vmatpush2.msra.mxu0 0.0
        %609 = vmatprep.subr.mxu0 0.0
        %610 = vmatpush2.msra.mxu0 0.0
        %611 = vmatprep.subr.mxu0 0.0
        %612 = vmatpush2.msra.mxu0 0.0
        %613 = vmatprep.subr.mxu0 0.0
        %614 = vmatpush2.msra.mxu0 0.0
        %615 = vmatprep.subr.mxu0 0.0
        %616 = vmatpush2.msra.mxu0 0.0
        %617 = vmatprep.mubr.f32.mxu0 0.0
        %v618 = vand.u32 %v240, 4294901760
        %v619 = vsub.f32 %v240, %v618
        %v620 = vand.u32 %v619, 4294901760
        %621 = vmatmul.mubr.f32.gmra.mxu0 %v620
        %v622 = vpop.f32.mrf.mxu0
        %v623 = vadd.f32 %v539, %v622
        %v624 = vpop.f32.mrf.mxu0
        %v625 = vadd.f32 %v541, %v624
        %626 = vdwg.mxu0
        %627 = vmatprep.subr.mxu0 0.0
        %628 = vmatpush1.msra.mxu0 0.0
        %629 = vmatprep.subr.mxu0 0.0
        %630 = vmatpush1.msra.mxu0 0.0
        %631 = vmatprep.subr.mxu0 0.0
        %632 = vmatpush1.msra.mxu0 0.0
        %633 = vmatprep.subr.mxu0 0.0
        %634 = vmatpush1.msra.mxu0 0.0
        %635 = vmatprep.subr.mxu0 0.0
        %636 = vmatpush1.msra.mxu0 0.0
        %637 = vmatprep.subr.mxu0 0.0
        %638 = vmatpush1.msra.mxu0 0.0
        %639 = vmatprep.subr.mxu0 0.0
        %640 = vmatpush1.msra.mxu0 0.0
        %641 = vmatprep.subr.mxu0 0.0
        %642 = vmatpush1.msra.mxu0 0.0
        %643 = vmatprep.subr.mxu0 0.0
        %644 = vmatpush1.msra.mxu0 0.0
        %645 = vmatprep.subr.mxu0 0.0
        %646 = vmatpush1.msra.mxu0 0.0
        %647 = vmatprep.subr.mxu0 0.0
        %648 = vmatpush1.msra.mxu0 0.0
        %v649 = vand.u32 %v237, 4294901760
        %v650 = vsub.f32 %v237, %v649
        %v651 = vand.u32 %v650, 4294901760
        %652 = vmatprep.subr.mxu0 %v651
        %v653 = vand.u32 %v236, 4294901760
        %v654 = vsub.f32 %v236, %v653
        %v655 = vand.u32 %v654, 4294901760
        %656 = vmatpush1.msra.mxu0 %v655
        %v657 = vand.u32 %v235, 4294901760
        %v658 = vsub.f32 %v235, %v657
        %v659 = vand.u32 %v658, 4294901760
        %660 = vmatprep.subr.mxu0 %v659
        %v661 = vand.u32 %v234, 4294901760
        %v662 = vsub.f32 %v234, %v661
        %v663 = vand.u32 %v662, 4294901760
        %664 = vmatpush1.msra.mxu0 %v663
        %v665 = vand.u32 %v233, 4294901760
        %v666 = vsub.f32 %v233, %v665
        %v667 = vand.u32 %v666, 4294901760
        %668 = vmatprep.subr.mxu0 %v667
        %v669 = vand.u32 %v232, 4294901760
        %v670 = vsub.f32 %v232, %v669
        %v671 = vand.u32 %v670, 4294901760
        %672 = vmatpush1.msra.mxu0 %v671
        %v673 = vand.u32 %v231, 4294901760
        %v674 = vsub.f32 %v231, %v673
        %v675 = vand.u32 %v674, 4294901760
        %676 = vmatprep.subr.mxu0 %v675
        %v677 = vand.u32 %v230, 4294901760
        %v678 = vsub.f32 %v230, %v677
        %v679 = vand.u32 %v678, 4294901760
        %680 = vmatpush1.msra.mxu0 %v679
        %v681 = vand.u32 %v229, 4294901760
        %v682 = vsub.f32 %v229, %v681
        %v683 = vand.u32 %v682, 4294901760
        %684 = vmatprep.subr.mxu0 %v683
        %v685 = vand.u32 %v228, 4294901760
        %v686 = vsub.f32 %v228, %v685
        %v687 = vand.u32 %v686, 4294901760
        %688 = vmatpush1.msra.mxu0 %v687
        %689 = vmatprep.subr.mxu0 0.0
        %690 = vmatpush2.msra.mxu0 0.0
        %691 = vmatprep.subr.mxu0 0.0
        %692 = vmatpush2.msra.mxu0 0.0
        %693 = vmatprep.subr.mxu0 0.0
        %694 = vmatpush2.msra.mxu0 0.0
        %695 = vmatprep.subr.mxu0 0.0
        %696 = vmatpush2.msra.mxu0 0.0
        %697 = vmatprep.subr.mxu0 0.0
        %698 = vmatpush2.msra.mxu0 0.0
        %699 = vmatprep.subr.mxu0 0.0
        %700 = vmatpush2.msra.mxu0 0.0
        %701 = vmatprep.subr.mxu0 0.0
        %702 = vmatpush2.msra.mxu0 0.0
        %703 = vmatprep.subr.mxu0 0.0
        %704 = vmatpush2.msra.mxu0 0.0
        %705 = vmatprep.subr.mxu0 0.0
        %706 = vmatpush2.msra.mxu0 0.0
        %707 = vmatprep.subr.mxu0 0.0
        %708 = vmatpush2.msra.mxu0 0.0
        %709 = vmatprep.subr.mxu0 0.0
        %710 = vmatpush2.msra.mxu0 0.0
        %711 = vmatprep.subr.mxu0 0.0
        %712 = vmatpush2.msra.mxu0 0.0
        %713 = vmatprep.subr.mxu0 0.0
        %714 = vmatpush2.msra.mxu0 0.0
        %715 = vmatprep.subr.mxu0 0.0
        %716 = vmatpush2.msra.mxu0 0.0
        %717 = vmatprep.subr.mxu0 0.0
        %718 = vmatpush2.msra.mxu0 0.0
        %719 = vmatprep.subr.mxu0 0.0
        %720 = vmatpush2.msra.mxu0 0.0
        %721 = vmatprep.mubr.f32.mxu0 0.0
        %v722 = vand.u32 %v240, 4294901760
        %723 = vmatmul.mubr.f32.gmra.mxu0 %v722
        %v724 = vpop.f32.mrf.mxu0
        %v725 = vadd.f32 %v623, %v724
        %v726 = vpop.f32.mrf.mxu0
        %v727 = vadd.f32 %v625, %v726
        %728 = vdwg.mxu0
        %729 = vmatprep.subr.mxu0 0.0
        %730 = vmatpush1.msra.mxu0 0.0
        %731 = vmatprep.subr.mxu0 0.0
        %732 = vmatpush1.msra.mxu0 0.0
        %733 = vmatprep.subr.mxu0 0.0
        %734 = vmatpush1.msra.mxu0 0.0
        %735 = vmatprep.subr.mxu0 0.0
        %736 = vmatpush1.msra.mxu0 0.0
        %737 = vmatprep.subr.mxu0 0.0
        %738 = vmatpush1.msra.mxu0 0.0
        %739 = vmatprep.subr.mxu0 0.0
        %740 = vmatpush1.msra.mxu0 0.0
        %741 = vmatprep.subr.mxu0 0.0
        %742 = vmatpush1.msra.mxu0 0.0
        %743 = vmatprep.subr.mxu0 0.0
        %744 = vmatpush1.msra.mxu0 0.0
        %745 = vmatprep.subr.mxu0 0.0
        %746 = vmatpush1.msra.mxu0 0.0
        %747 = vmatprep.subr.mxu0 0.0
        %748 = vmatpush1.msra.mxu0 0.0
        %749 = vmatprep.subr.mxu0 0.0
        %750 = vmatpush1.msra.mxu0 0.0
        %v751 = vand.u32 %v237, 4294901760
        %752 = vmatprep.subr.mxu0 %v751
        %v753 = vand.u32 %v236, 4294901760
        %754 = vmatpush1.msra.mxu0 %v753
        %v755 = vand.u32 %v235, 4294901760
        %756 = vmatprep.subr.mxu0 %v755
        %v757 = vand.u32 %v234, 4294901760
        %758 = vmatpush1.msra.mxu0 %v757
        %v759 = vand.u32 %v233, 4294901760
        %760 = vmatprep.subr.mxu0 %v759
        %v761 = vand.u32 %v232, 4294901760
        %762 = vmatpush1.msra.mxu0 %v761
        %v763 = vand.u32 %v231, 4294901760
        %764 = vmatprep.subr.mxu0 %v763
        %v765 = vand.u32 %v230, 4294901760
        %766 = vmatpush1.msra.mxu0 %v765
        %v767 = vand.u32 %v229, 4294901760
        %768 = vmatprep.subr.mxu0 %v767
        %v769 = vand.u32 %v228, 4294901760
        %770 = vmatpush1.msra.mxu0 %v769
        %771 = vmatprep.subr.mxu0 0.0
        %772 = vmatpush2.msra.mxu0 0.0
        %773 = vmatprep.subr.mxu0 0.0
        %774 = vmatpush2.msra.mxu0 0.0
        %775 = vmatprep.subr.mxu0 0.0
        %776 = vmatpush2.msra.mxu0 0.0
        %777 = vmatprep.subr.mxu0 0.0
        %778 = vmatpush2.msra.mxu0 0.0
        %779 = vmatprep.subr.mxu0 0.0
        %780 = vmatpush2.msra.mxu0 0.0
        %781 = vmatprep.subr.mxu0 0.0
        %782 = vmatpush2.msra.mxu0 0.0
        %783 = vmatprep.subr.mxu0 0.0
        %784 = vmatpush2.msra.mxu0 0.0
        %785 = vmatprep.subr.mxu0 0.0
        %786 = vmatpush2.msra.mxu0 0.0
        %787 = vmatprep.subr.mxu0 0.0
        %788 = vmatpush2.msra.mxu0 0.0
        %789 = vmatprep.subr.mxu0 0.0
        %790 = vmatpush2.msra.mxu0 0.0
        %791 = vmatprep.subr.mxu0 0.0
        %792 = vmatpush2.msra.mxu0 0.0
        %793 = vmatprep.subr.mxu0 0.0
        %794 = vmatpush2.msra.mxu0 0.0
        %795 = vmatprep.subr.mxu0 0.0
        %796 = vmatpush2.msra.mxu0 0.0
        %797 = vmatprep.subr.mxu0 0.0
        %798 = vmatpush2.msra.mxu0 0.0
        %799 = vmatprep.subr.mxu0 0.0
        %800 = vmatpush2.msra.mxu0 0.0
        %801 = vmatprep.subr.mxu0 0.0
        %802 = vmatpush2.msra.mxu0 0.0
        %803 = vmatprep.mubr.f32.mxu0 0.0
        %v804 = vand.u32 %v240, 4294901760
        %805 = vmatmul.mubr.f32.gmra.mxu0 %v804
        %v806 = vpop.f32.mrf.mxu0
        %v807 = vadd.f32 %v725, %v806
        %v808 = vpop.f32.mrf.mxu0
        %v809 = vadd.f32 %v727, %v808
        %810 = vdwg.mxu0
        %811 = vst [vmem:[%s223] sm:$0xff] %v807
        %812 = vst [vmem:[%s223 + $0x8] sm:$0xff] %v809
        %s813 = sand.u32 %s116, 1
        %s814 = scalar_lea.sflag [#allocation4], %s813
        %s815 = sand.u32 %s116, 1
        %s816 = smul.addr %s815, 16
        %s817 = scalar_lea.vmem [#allocation7], %s816
        // Predicated region
        $region37: #{tpu_custom_call.1} parent=27 // pred_check
          %p818 = pneg %p126
        $region38: #{tpu_custom_call.1} parent=27 // pred_check_branch
          %820 = sbr.rel (%p818) target = $region40
        $region39: #{tpu_custom_call.1} parent=27 // pred_region
          %s821 = smul.u32 2, %s28
          %s823 = ssub.s32 256, 256
          %824 = vsyncadd %s814, %s823
          %s825 = smul.addr %s27, 2
          %s826 = sadd.s32 %s821, %s825
          %s827 = smul.addr %s26, 2
          %s828 = sadd.s32 %s826, %s827
          %s829 = smul.addr %s828, 128
          %s830 = scalar_lea.hbm %s2, %s829
          %s832 = sshll.u32 %s817, 4
          %s833 = int_to_ptr.vmem [resolvable:$true] %s832
          %835 = dma.vmem_to_hbm [thread:$0]  %s833, 256, %s830, %s814
        $region40: #{tpu_custom_call.1} parent=27 // pred_fallthru
          _
      $region28: #{tpu_custom_call.1} parent=5 // pred_fallthru
        _
      %p836 = scmp.le.s32.totalorder 2, %s15
      // Predicated region
      $region41: #{tpu_custom_call.1} parent=5 // pred_check
        %p837 = pneg %p836
      $region42: #{tpu_custom_call.1} parent=5 // pred_check_branch
        %839 = sbr.rel (%p837) target = $region44
      $region43: #{tpu_custom_call.1} parent=5 // pred_region
        %s840 = ssub.s32 %s15, 2
        // Predicated region
        $region45: #{tpu_custom_call.1} parent=43 // pred_check
          %p841 = pneg %p132
        $region46: #{tpu_custom_call.1} parent=43 // pred_check_branch
          %843 = sbr.rel (%p841) target = $region48
        $region47: #{tpu_custom_call.1} parent=43 // pred_region
          %s844 = sand.u32 %s117, 1
          %s845 = scalar_lea.sflag [#allocation4], %s844
          %s846 = sand.u32 %s117, 1
          %s847 = smul.addr %s846, 16
          %s848 = scalar_lea.vmem [#allocation7], %s847
          %849 = dma.done %s845, 256
        $region48: #{tpu_custom_call.1} parent=43 // pred_fallthru
          _
      $region44: #{tpu_custom_call.1} parent=5 // pred_fallthru
        _
    $region6: #{tpu_custom_call.1} parent=1 // loop_footer
      %s19 = sadd.s32 1, %s15
    $region7: #{tpu_custom_call.1} parent=1 // loop_footer_branch
      %14 = sbr.rel target = $region3
    $region8: #{tpu_custom_call.1} parent=1 // loop_exit
      _
    %850 = vsyncpa [#allocation3], 1
    %s851 = scalar_lea.sflag [#allocation3], 1
    %852 = vsyncpa %s851, 1
    %853 = vsyncpa [#allocation6], 1
    %s854 = scalar_lea.sflag [#allocation6], 1
    %855 = vsyncpa %s854, 1
    %856 = vsyncpa [#allocation4], 1
    %s857 = scalar_lea.sflag [#allocation4], 1
    %858 = vsyncpa %s857, 1

</llo_original>
